<compile_context>
chip_gen: v5e
topology: v5e:2x2
jax: 0.10.0
libtpu: 0.0.40
codegen_flags: <defaults>
</compile_context>

<pallas_src>
import jax
import jax.numpy as jnp
from jax.experimental import pallas as pl
from jax.experimental.pallas import tpu as pltpu


def conv3x3_relu_kernel(x_ref, w_ref, b_ref, o_ref, xpad_ref):
    # x_ref:    (B, H, W*Cin)        unpadded input, (W, Cin) flattened into lanes
    # w_ref:    (3*W*Cin, W*Cout)    banded im2col weight (W 'same' padding folded in)
    # b_ref:    (1, W*Cout)          bias tiled over W (lane-dense)
    # o_ref:    (B, H, W*Cout)       output, (W, Cout) flattened into lanes
    # xpad_ref: (B, H+2, W*Cin)      VMEM scratch: input zero-padded along H only
    B, H, WCin = x_ref.shape
    N = o_ref.shape[-1]

    # Fused 'same' zero padding along H: zero-init scratch, copy image into rows [1, H].
    xpad_ref[...] = jnp.zeros_like(xpad_ref)
    xpad_ref[:, 1:H + 1, :] = x_ref[...].astype(xpad_ref.dtype)

    # im2col matmul against the banded weight: M = B*H, K = 3*W*Cin, N = W*Cout.
    # Issued as 3 row-shifted, lane-dense MXU dots (one per kernel row dh).
    acc = jnp.zeros((B * H, N), dtype=jnp.float32)
    for dh in range(3):
        lhs = xpad_ref[:, dh:dh + H, :].reshape(B * H, WCin)        # (32, 64)
        acc += jnp.dot(lhs, w_ref[dh * WCin:(dh + 1) * WCin, :],    # (64, 128)
                       preferred_element_type=jnp.float32)

    acc = acc + b_ref[...].astype(jnp.float32)   # bias (broadcast over M)
    acc = jnp.maximum(acc, 0.0)                  # ReLU (f32 VPU epilogue)
    o_ref[...] = acc.reshape(B, H, N).astype(o_ref.dtype)


def _build_banded_weight(weight_oihw, W):
    """(Cout, Cin, 3, 3) -> (3*W*Cin, W*Cout) banded im2col weight.

    W_flat[dh*(W*Cin) + win*Cin + ci, w*Cout + co] =
        weight[co, ci, dh, win - w + 1]   if 0 <= win - w + 1 <= 2 else 0
    so that  out[b, h, w*Cout+co] = sum_{dh, win, ci} xHpad[b, h+dh, win*Cin+ci] * W_flat[...]
    reproduces the 3x3 'same' convolution (W-boundary zeros are implicit in the band).
    """
    Cout, Cin, KH, KW = weight_oihw.shape
    w_dhwc = jnp.transpose(weight_oihw, (2, 3, 1, 0))            # (dh, dw, ci, co)
    dw = jnp.arange(W)[:, None] - jnp.arange(W)[None, :] + 1     # (win, wout)
    valid = (dw >= 0) & (dw <= KW - 1)
    g = w_dhwc[:, jnp.clip(dw, 0, KW - 1)]                       # (dh, win, wout, ci, co)
    g = jnp.where(valid[None, :, :, None, None], g, 0.0)
    g = jnp.transpose(g, (0, 1, 3, 2, 4))                        # (dh, win, ci, wout, co)
    return g.reshape(KH * W * Cin, W * Cout)


def block_forward(x_nchw, weight_oihw, bias):
    """relu(conv2d(x, weight, padding='same')) with PyTorch NCHW input/output."""
    B, Cin, H, W = x_nchw.shape
    Cout = weight_oihw.shape[0]
    K = 3 * W * Cin
    N = W * Cout

    # Tiny layout plumbing (done once under jit): pack Cin into lanes, build the
    # banded weight and the W-tiled bias row.  No jnp.pad of the activations.
    x2d = jnp.transpose(x_nchw, (0, 2, 3, 1)).reshape(B, H, W * Cin)
    w_flat = _build_banded_weight(weight_oihw.astype(jnp.float32), W)
    bias_row = jnp.tile(bias.astype(jnp.float32), W).reshape(1, N)

    out_flat = pl.pallas_call(
        conv3x3_relu_kernel,
        out_shape=jax.ShapeDtypeStruct((B, H, N), x_nchw.dtype),
        grid_spec=pltpu.PrefetchScalarGridSpec(
            num_scalar_prefetch=0,
            grid=(1,),                               # whole batch in one invocation
            in_specs=[
                pl.BlockSpec((B, H, W * Cin), lambda i: (0, 0, 0)),
                pl.BlockSpec((K, N), lambda i: (0, 0)),
                pl.BlockSpec((1, N), lambda i: (0, 0)),
            ],
            out_specs=pl.BlockSpec((B, H, N), lambda i: (0, 0, 0)),
            scratch_shapes=[pltpu.VMEM((B, H + 2, W * Cin), jnp.float32)],
        ),
        compiler_params=pltpu.CompilerParams(
            dimension_semantics=("arbitrary",),
        ),
    )(x2d, w_flat, bias_row)

    # (B, H, W*Cout) -> NCHW to match the PyTorch output convention (tiny tensor).
    return jnp.transpose(out_flat.reshape(B, H, W, Cout), (0, 3, 1, 2))


if __name__ == "__main__":
    # Small shapes consistent with the module: batch=2, in_chans=4, out_chans=8, 16x16.
    B, Cin, Cout, H, W = 2, 4, 8, 16, 16

    key = jax.random.PRNGKey(0)
    kx, kw, kb = jax.random.split(key, 3)

    x = jax.random.normal(kx, (B, Cin, H, W), dtype=jnp.float32)
    # Deterministic Conv2d params in PyTorch layout: weight (out, in, 3, 3), bias (out,).
    fan_in = Cin * 3 * 3
    bound = 1.0 / (fan_in ** 0.5)
    weight_oihw = jax.random.uniform(
        kw, (Cout, Cin, 3, 3), minval=-bound, maxval=bound, dtype=jnp.float32)
    bias = jax.random.uniform(
        kb, (Cout,), minval=-bound, maxval=bound, dtype=jnp.float32)

    fwd = jax.jit(block_forward)
    out = jax.block_until_ready(fwd(x, weight_oihw, bias))

    # Reference: XLA conv (NCHW, 'same') + bias + relu.
    ref = jax.lax.conv_general_dilated(
        x, weight_oihw, window_strides=(1, 1), padding="SAME",
        dimension_numbers=("NCHW", "OIHW", "NCHW"),
    ) + bias.reshape(1, Cout, 1, 1)
    ref = jnp.maximum(ref, 0.0)

    assert out.shape == (B, Cout, H, W)
    assert jnp.allclose(out, ref, atol=1e-4, rtol=1e-4)

    print("KERNEL_OK")
</pallas_src>

<mosaic_0001>
module attributes {stable_mosaic.version = 11 : i64} {
  func.func @conv3x3_relu_kernel(%arg0: i32, %arg1: memref<2x16x64xf32, #tpu.memory_space<vmem>>, %arg2: memref<192x128xf32, #tpu.memory_space<vmem>>, %arg3: memref<1x128xf32, #tpu.memory_space<vmem>>, %arg4: memref<2x16x128xf32, #tpu.memory_space<vmem>>, %arg5: memref<2x18x64xf32, #tpu.memory_space<vmem>>) attributes {dimension_semantics = [#tpu.dimension_semantics<arbitrary>], iteration_bounds = array<i64: 1>, scalar_prefetch = 0 : i64, scratch_operands = 1 : i64, tpu.core_type = #tpu.core_type<tc>, window_params = [{pipeline_mode = #tpu.pipeline_mode<synchronous>, transform_indices = @transform_0, window_bounds = array<i64: 2, 16, 64>}, {pipeline_mode = #tpu.pipeline_mode<synchronous>, transform_indices = @transform_1, window_bounds = array<i64: 192, 128>}, {pipeline_mode = #tpu.pipeline_mode<synchronous>, transform_indices = @transform_2, window_bounds = array<i64: 1, 128>}, {pipeline_mode = #tpu.pipeline_mode<synchronous>, transform_indices = @transform_3, window_bounds = array<i64: 2, 16, 128>}]} {
    %cst = arith.constant 0.000000e+00 : f32
    %0 = vector.broadcast %cst : f32 to vector<2x18x64xf32>
    %c0 = arith.constant 0 : index
    %c0_0 = arith.constant 0 : index
    %c0_1 = arith.constant 0 : index
    %1 = vector.load %arg5[%c0, %c0_0, %c0_1] : memref<2x18x64xf32, #tpu.memory_space<vmem>>, vector<2x18x64xf32>
    tpu.vector_store %arg5[%c0, %c0_0, %c0_1], %0 {strides = array<i32>} : memref<2x18x64xf32, #tpu.memory_space<vmem>>, vector<2x18x64xf32>,
    %c0_2 = arith.constant 0 : index
    %c0_3 = arith.constant 0 : index
    %c0_4 = arith.constant 0 : index
    %2 = vector.load %arg1[%c0_2, %c0_3, %c0_4] : memref<2x16x64xf32, #tpu.memory_space<vmem>>, vector<2x16x64xf32>
    %c0_5 = arith.constant 0 : index
    %c1 = arith.constant 1 : index
    %c0_6 = arith.constant 0 : index
    %3 = vector.load %arg5[%c0_5, %c1, %c0_6] : memref<2x18x64xf32, #tpu.memory_space<vmem>>, vector<2x16x64xf32>
    tpu.vector_store %arg5[%c0_5, %c1, %c0_6], %2 {strides = array<i32>} : memref<2x18x64xf32, #tpu.memory_space<vmem>>, vector<2x16x64xf32>,
    %cst_7 = arith.constant 0.000000e+00 : f32
    %4 = vector.broadcast %cst_7 : f32 to vector<32x128xf32>
    %c0_8 = arith.constant 0 : index
    %c0_9 = arith.constant 0 : index
    %c0_10 = arith.constant 0 : index
    %5 = vector.load %arg5[%c0_8, %c0_9, %c0_10] : memref<2x18x64xf32, #tpu.memory_space<vmem>>, vector<2x16x64xf32>
    %6 = vector.shape_cast %5 : vector<2x16x64xf32> to vector<32x64xf32>
    %c0_11 = arith.constant 0 : index
    %c0_12 = arith.constant 0 : index
    %7 = vector.load %arg2[%c0_11, %c0_12] : memref<192x128xf32, #tpu.memory_space<vmem>>, vector<64x128xf32>
    %cst_13 = arith.constant dense<0.000000e+00> : vector<32x128xf32>
    %8 = tpu.matmul %6, %7, %cst_13 {dimension_numbers = #tpu.dot_dimension_numbers<[1], [0], [0], [1], [0, 0, 1, 1], [], []>} : vector<32x64xf32>, vector<64x128xf32>, vector<32x128xf32> -> vector<32x128xf32>
    %9 = arith.addf %4, %8 : vector<32x128xf32>
    %c0_14 = arith.constant 0 : index
    %c1_15 = arith.constant 1 : index
    %c0_16 = arith.constant 0 : index
    %10 = vector.load %arg5[%c0_14, %c1_15, %c0_16] : memref<2x18x64xf32, #tpu.memory_space<vmem>>, vector<2x16x64xf32>
    %11 = vector.shape_cast %10 : vector<2x16x64xf32> to vector<32x64xf32>
    %c64 = arith.constant 64 : index
    %c0_17 = arith.constant 0 : index
    %12 = vector.load %arg2[%c64, %c0_17] : memref<192x128xf32, #tpu.memory_space<vmem>>, vector<64x128xf32>
    %cst_18 = arith.constant dense<0.000000e+00> : vector<32x128xf32>
    %13 = tpu.matmul %11, %12, %cst_18 {dimension_numbers = #tpu.dot_dimension_numbers<[1], [0], [0], [1], [0, 0, 1, 1], [], []>} : vector<32x64xf32>, vector<64x128xf32>, vector<32x128xf32> -> vector<32x128xf32>
    %14 = arith.addf %9, %13 : vector<32x128xf32>
    %c0_19 = arith.constant 0 : index
    %c2 = arith.constant 2 : index
    %c0_20 = arith.constant 0 : index
    %15 = vector.load %arg5[%c0_19, %c2, %c0_20] : memref<2x18x64xf32, #tpu.memory_space<vmem>>, vector<2x16x64xf32>
    %16 = vector.shape_cast %15 : vector<2x16x64xf32> to vector<32x64xf32>
    %c128 = arith.constant 128 : index
    %c0_21 = arith.constant 0 : index
    %17 = vector.load %arg2[%c128, %c0_21] : memref<192x128xf32, #tpu.memory_space<vmem>>, vector<64x128xf32>
    %cst_22 = arith.constant dense<0.000000e+00> : vector<32x128xf32>
    %18 = tpu.matmul %16, %17, %cst_22 {dimension_numbers = #tpu.dot_dimension_numbers<[1], [0], [0], [1], [0, 0, 1, 1], [], []>} : vector<32x64xf32>, vector<64x128xf32>, vector<32x128xf32> -> vector<32x128xf32>
    %19 = arith.addf %14, %18 : vector<32x128xf32>
    %c0_23 = arith.constant 0 : index
    %c0_24 = arith.constant 0 : index
    %20 = vector.load %arg3[%c0_23, %c0_24] : memref<1x128xf32, #tpu.memory_space<vmem>>, vector<1x128xf32>
    %21 = vector.broadcast %20 : vector<1x128xf32> to vector<32x128xf32>
    %22 = arith.addf %19, %21 : vector<32x128xf32>
    %cst_25 = arith.constant 0.000000e+00 : f32
    %23 = vector.broadcast %cst_25 : f32 to vector<32x128xf32>
    %24 = arith.maximumf %22, %23 : vector<32x128xf32>
    %25 = vector.shape_cast %24 : vector<32x128xf32> to vector<2x16x128xf32>
    %c0_26 = arith.constant 0 : index
    %c0_27 = arith.constant 0 : index
    %c0_28 = arith.constant 0 : index
    %26 = vector.load %arg4[%c0_26, %c0_27, %c0_28] : memref<2x16x128xf32, #tpu.memory_space<vmem>>, vector<2x16x128xf32>
    tpu.vector_store %arg4[%c0_26, %c0_27, %c0_28], %25 {strides = array<i32>} : memref<2x16x128xf32, #tpu.memory_space<vmem>>, vector<2x16x128xf32>,
    return
  }
  func.func @transform_0(%arg0: i32) -> (i32, i32, i32) {
    %c0_i32 = arith.constant 0 : i32
    %c0_i32_0 = arith.constant 0 : i32
    %c0_i32_1 = arith.constant 0 : i32
    %c0_i32_2 = arith.constant 0 : i32
    return %c0_i32, %c0_i32_0, %c0_i32_1 : i32, i32, i32
  }
  func.func @transform_1(%arg0: i32) -> (i32, i32) {
    %c0_i32 = arith.constant 0 : i32
    %c0_i32_0 = arith.constant 0 : i32
    %c0_i32_1 = arith.constant 0 : i32
    return %c0_i32, %c0_i32_0 : i32, i32
  }
  func.func @transform_2(%arg0: i32) -> (i32, i32) {
    %c0_i32 = arith.constant 0 : i32
    %c0_i32_0 = arith.constant 0 : i32
    %c0_i32_1 = arith.constant 0 : i32
    return %c0_i32, %c0_i32_0 : i32, i32
  }
  func.func @transform_3(%arg0: i32) -> (i32, i32, i32) {
    %c0_i32 = arith.constant 0 : i32
    %c0_i32_0 = arith.constant 0 : i32
    %c0_i32_1 = arith.constant 0 : i32
    %c0_i32_2 = arith.constant 0 : i32
    return %c0_i32, %c0_i32_0, %c0_i32_1 : i32, i32, i32
  }
}

</mosaic_0001>

<llo_original>
// kernel: tile.8
$region0: #{tile.8}
  #allocation0 [shape = 's32[1]{0}', space=sflag, size = 0x4, scoped, tag = 'scoped memory for tile.8']
  %s0 = inlined_call_operand.vmem [shape: f32[8], index: 0, kind: input, shape index: {}]
  %s1 = inlined_call_operand.vmem [shape: f32[16,8], index: 1, kind: output, shape index: {}]
  // Predicated region
  $region2: #{tile.8} parent=0 // pred_check
    _
  $region3: #{tile.8} parent=0 // pred_check_branch
    %3 = sbr.rel (0) target = $region5
  $region4: #{tile.8} parent=0 // pred_region
    _
  $region5: #{tile.8} parent=0 // pred_fallthru
    _
  %v4 = vld [vmem:[%s0] ss:$0 sm:$0xff]
  %5 = vst [vmem:[%s1] sm:$0xff] %v4
  %s6 = scalar_lea.vmem %s1, 8
  %7 = vst [vmem:[%s6] sm:$0xff] %v4

// kernel: tile.9
$region0: #{tile.9}
  %s0 = inlined_call_operand.vmem [shape: f32[16,8], index: 0, kind: input, shape index: {}]
  %s1 = inlined_call_operand.vmem [shape: f32[1,128], index: 1, kind: output, shape index: {}]
  $region1: #{tile.9} parent=0
    #allocation0 [shape = 'u8[4096]{0}', space=vmem, size = 0x1000, scoped, tag = 'scoped mem for output reshape']
    %v2 = vld [vmem:[%s0] sm:$0x1]
    %vm3 = vcmask 64512
    %4 = vst.msk [vmem:[#allocation0] sm:$0x1] %vm3, %v2
    %s5 = scalar_lea.vmem %s0, 15
    %v6 = vld [vmem:[%s5] sm:$0x1]
    %7 = vrot.lane.b32.xlu0 %v6, 120
    %v8 = vpop.permute.xlu0 %7
    %vm9 = vcmask 1048512
    %10 = vst.msk [vmem:[#allocation0] sm:$0x1] %vm9, %v8
    %s11 = scalar_lea.vmem %s0, 14
    %v12 = vld [vmem:[%s11] sm:$0x1]
    %13 = vrot.lane.b32.xlu0 %v12, 112
    %v14 = vpop.permute.xlu0 %13
    %vm15 = vcmask 982912
    %16 = vst.msk [vmem:[#allocation0] sm:$0x1] %vm15, %v14
    %s17 = scalar_lea.vmem %s0, 13
    %v18 = vld [vmem:[%s17] sm:$0x1]
    %19 = vrot.lane.b32.xlu0 %v18, 104
    %v20 = vpop.permute.xlu0 %19
    %vm21 = vcmask 917312
    %22 = vst.msk [vmem:[#allocation0] sm:$0x1] %vm21, %v20
    %s23 = scalar_lea.vmem %s0, 12
    %v24 = vld [vmem:[%s23] sm:$0x1]
    %25 = vrot.lane.b32.xlu0 %v24, 96
    %v26 = vpop.permute.xlu0 %25
    %vm27 = vcmask 851712
    %28 = vst.msk [vmem:[#allocation0] sm:$0x1] %vm27, %v26
    %s29 = scalar_lea.vmem %s0, 11
    %v30 = vld [vmem:[%s29] sm:$0x1]
    %31 = vrot.lane.b32.xlu0 %v30, 88
    %v32 = vpop.permute.xlu0 %31
    %vm33 = vcmask 786112
    %34 = vst.msk [vmem:[#allocation0] sm:$0x1] %vm33, %v32
    %s35 = scalar_lea.vmem %s0, 10
    %v36 = vld [vmem:[%s35] sm:$0x1]
    %37 = vrot.lane.b32.xlu0 %v36, 80
    %v38 = vpop.permute.xlu0 %37
    %vm39 = vcmask 720512
    %40 = vst.msk [vmem:[#allocation0] sm:$0x1] %vm39, %v38
    %s41 = scalar_lea.vmem %s0, 9
    %v42 = vld [vmem:[%s41] sm:$0x1]
    %43 = vrot.lane.b32.xlu0 %v42, 72
    %v44 = vpop.permute.xlu0 %43
    %vm45 = vcmask 654912
    %46 = vst.msk [vmem:[#allocation0] sm:$0x1] %vm45, %v44
    %s47 = scalar_lea.vmem %s0, 8
    %v48 = vld [vmem:[%s47] sm:$0x1]
    %49 = vrot.lane.b32.xlu0 %v48, 64
    %v50 = vpop.permute.xlu0 %49
    %vm51 = vcmask 589312
    %52 = vst.msk [vmem:[#allocation0] sm:$0x1] %vm51, %v50
    %s53 = scalar_lea.vmem %s0, 7
    %v54 = vld [vmem:[%s53] sm:$0x1]
    %55 = vrot.lane.b32.xlu0 %v54, 56
    %v56 = vpop.permute.xlu0 %55
    %vm57 = vcmask 523712
    %58 = vst.msk [vmem:[#allocation0] sm:$0x1] %vm57, %v56
    %s59 = scalar_lea.vmem %s0, 6
    %v60 = vld [vmem:[%s59] sm:$0x1]
    %61 = vrot.lane.b32.xlu0 %v60, 48
    %v62 = vpop.permute.xlu0 %61
    %vm63 = vcmask 458112
    %64 = vst.msk [vmem:[#allocation0] sm:$0x1] %vm63, %v62
    %s65 = scalar_lea.vmem %s0, 5
    %v66 = vld [vmem:[%s65] sm:$0x1]
    %67 = vrot.lane.b32.xlu0 %v66, 40
    %v68 = vpop.permute.xlu0 %67
    %vm69 = vcmask 392512
    %70 = vst.msk [vmem:[#allocation0] sm:$0x1] %vm69, %v68
    %s71 = scalar_lea.vmem %s0, 4
    %v72 = vld [vmem:[%s71] sm:$0x1]
    %73 = vrot.lane.b32.xlu0 %v72, 32
    %v74 = vpop.permute.xlu0 %73
    %vm75 = vcmask 326912
    %76 = vst.msk [vmem:[#allocation0] sm:$0x1] %vm75, %v74
    %s77 = scalar_lea.vmem %s0, 3
    %v78 = vld [vmem:[%s77] sm:$0x1]
    %79 = vrot.lane.b32.xlu0 %v78, 24
    %v80 = vpop.permute.xlu0 %79
    %vm81 = vcmask 261312
    %82 = vst.msk [vmem:[#allocation0] sm:$0x1] %vm81, %v80
    %s83 = scalar_lea.vmem %s0, 2
    %v84 = vld [vmem:[%s83] sm:$0x1]
    %85 = vrot.lane.b32.xlu0 %v84, 16
    %v86 = vpop.permute.xlu0 %85
    %vm87 = vcmask 195712
    %88 = vst.msk [vmem:[#allocation0] sm:$0x1] %vm87, %v86
    %s89 = scalar_lea.vmem %s0, 1
    %v90 = vld [vmem:[%s89] sm:$0x1]
    %91 = vrot.lane.b32.xlu0 %v90, 8
    %v92 = vpop.permute.xlu0 %91
    %vm93 = vcmask 130112
    %94 = vst.msk [vmem:[#allocation0] sm:$0x1] %vm93, %v92
    %s96 = ssub.s32 2, 1
    %v97 = vld [vmem:[#allocation0] sm:%s96]
    %s99 = ssub.s32 2, 1
    %100 = vst [vmem:[%s1] sm:%s99] %v97

// kernel: block_forward.1
$region0: #{block_forward.1}
  #allocation0 [shape = 'u32[]', space=smem, size = 0x4, offset = 0x4, fixed_abs, tag = 'smem constant byte address 0x4 - core index']
  #allocation1 [shape = 'u32[72,128]{1,0:T(1,128)}', space=vmem, size = 0x9000, scoped, tag = 'internal scratch']
  #allocation2 [shape = 'f32[2,18,64]{2,1,0:T(8,128)}', space=vmem, size = 0x6000, scoped, tag = 'scratch operand']
  %s0 = inlined_call_operand.vmem [shape: f32[2,16,64], index: 0, kind: input, shape index: {}]
  %s1 = inlined_call_operand.vmem [shape: f32[192,128], index: 1, kind: input, shape index: {}]
  %s2 = inlined_call_operand.vmem [shape: f32[1,128], index: 2, kind: input, shape index: {}]
  %s3 = inlined_call_operand.vmem [shape: f32[2,16,128], index: 3, kind: output, shape index: {}]
  %s4 = sld [smem:[#allocation0]]
  $region22: #{block_forward.1} parent=0
    _
  %s6 = ssub.s32 1, %s4
  %s7 = scalar_select 0, %s6, %s4
  // Predicated region
  $region2: #{block_forward.1} parent=0 // pred_check
    _
  $region3: #{block_forward.1} parent=0 // pred_check_branch
    %9 = sbr.rel (0) target = $region5
  $region4: #{block_forward.1} parent=0 // pred_region
    _
  $region5: #{block_forward.1} parent=0 // pred_fallthru
    _
  // Predicated region
  $region6: #{block_forward.1} parent=0 // pred_check
    _
  $region7: #{block_forward.1} parent=0 // pred_check_branch
    %11 = sbr.rel (0) target = $region9
  $region8: #{block_forward.1} parent=0 // pred_region
    _
  $region9: #{block_forward.1} parent=0 // pred_fallthru
    _
  // Predicated region
  $region10: #{block_forward.1} parent=0 // pred_check
    _
  $region11: #{block_forward.1} parent=0 // pred_check_branch
    %13 = sbr.rel (0) target = $region13
  $region12: #{block_forward.1} parent=0 // pred_region
    _
  $region13: #{block_forward.1} parent=0 // pred_fallthru
    _
  %vm14 = vcmask 523264
  %15 = vst.msk [vmem:[#allocation2] sm:$0xff] %vm14, 0.0
  %16 = vst.msk [vmem:[#allocation2 + $0x8] sm:$0xff] %vm14, 0.0
  %vm17 = vcmask 517120
  %18 = vst.msk [vmem:[#allocation2 + $0x10] sm:$0x3] %vm17, 0.0
  %19 = vst.msk [vmem:[#allocation2 + $0x18] sm:$0xff] %vm14, 0.0
  %20 = vst.msk [vmem:[#allocation2 + $0x20] sm:$0xff] %vm14, 0.0
  %21 = vst.msk [vmem:[#allocation2 + $0x28] sm:$0x3] %vm17, 0.0
  %v22 = vld [vmem:[%s0] sm:$0xff]
  %v23 = vld [vmem:[%s0 + $0x8] sm:$0xff]
  %v24 = vld [vmem:[%s0 + $0x10] sm:$0xff]
  %v25 = vld [vmem:[%s0 + $0x18] sm:$0xff]
  %26 = vst.msk [vmem:[#allocation2 + $0x1] sm:$0xff] %vm14, %v22
  %27 = vst.msk [vmem:[#allocation2 + $0x9] sm:$0xff] %vm14, %v23
  %28 = vst.msk [vmem:[#allocation2 + $0x19] sm:$0xff] %vm14, %v24
  %29 = vst.msk [vmem:[#allocation2 + $0x21] sm:$0xff] %vm14, %v25
  %v30 = vld [vmem:[#allocation2] sm:$0xff]
  %v31 = vld [vmem:[#allocation2 + $0x8] sm:$0xff]
  %v32 = vld [vmem:[#allocation2 + $0x18] sm:$0xff]
  %v33 = vld [vmem:[#allocation2 + $0x20] sm:$0xff]
  %v34 = vld [vmem:[%s1] sm:$0xff]
  %v35 = vld [vmem:[%s1 + $0x8] sm:$0xff]
  %v36 = vld [vmem:[%s1 + $0x10] sm:$0xff]
  %v37 = vld [vmem:[%s1 + $0x18] sm:$0xff]
  %v38 = vld [vmem:[%s1 + $0x20] sm:$0xff]
  %v39 = vld [vmem:[%s1 + $0x28] sm:$0xff]
  %v40 = vld [vmem:[%s1 + $0x30] sm:$0xff]
  %v41 = vld [vmem:[%s1 + $0x38] sm:$0xff]
  %v42 = vld [vmem:[#allocation2 + $0x1] sm:$0xff]
  %v43 = vld [vmem:[#allocation2 + $0x9] sm:$0xff]
  %v44 = vld [vmem:[#allocation2 + $0x19] sm:$0xff]
  %v45 = vld [vmem:[#allocation2 + $0x21] sm:$0xff]
  %v46 = vld [vmem:[%s1 + $0x40] sm:$0xff]
  %v47 = vld [vmem:[%s1 + $0x48] sm:$0xff]
  %v48 = vld [vmem:[%s1 + $0x50] sm:$0xff]
  %v49 = vld [vmem:[%s1 + $0x58] sm:$0xff]
  %v50 = vld [vmem:[%s1 + $0x60] sm:$0xff]
  %v51 = vld [vmem:[%s1 + $0x68] sm:$0xff]
  %v52 = vld [vmem:[%s1 + $0x70] sm:$0xff]
  %v53 = vld [vmem:[%s1 + $0x78] sm:$0xff]
  %v55 = vsel %vm14, %v42, 0
  %v58 = vsel %vm14, %v43, 0
  %v61 = vsel %vm14, %v44, 0
  %v64 = vsel %vm14, %v45, 0
  %66 = vmatpush.msra.mxu0 0.0
  %67 = vmatpush.msra.mxu0 0.0
  %68 = vmatpush.msra.mxu0 0.0
  %69 = vmatpush.msra.mxu0 0.0
  %70 = vmatpush.msra.mxu0 0.0
  %71 = vmatpush.msra.mxu0 0.0
  %72 = vmatpush.msra.mxu0 0.0
  %73 = vmatpush.msra.mxu0 0.0
  %74 = vmatpush.msra.mxu0 %v53
  %75 = vmatpush.msra.mxu0 %v52
  %76 = vmatpush.msra.mxu0 %v51
  %77 = vmatpush.msra.mxu0 %v50
  %78 = vmatpush.msra.mxu0 %v49
  %79 = vmatpush.msra.mxu0 %v48
  %80 = vmatpush.msra.mxu0 %v47
  %81 = vmatpush.msra.mxu0 %v46
  %82 = vmatmul.f32.gmra.mxu0 %v55
  %v83 = vpop.f32.mrf.mxu0
  %v84 = vadd.f32 0.0, %v83
  %85 = vmatmul.f32.gmra.mxu0 %v58
  %v86 = vpop.f32.mrf.mxu0
  %v87 = vadd.f32 0.0, %v86
  %88 = vmatmul.f32.gmra.mxu0 %v61
  %v89 = vpop.f32.mrf.mxu0
  %v90 = vadd.f32 0.0, %v89
  %91 = vmatmul.f32.gmra.mxu0 %v64
  %v92 = vpop.f32.mrf.mxu0
  %v93 = vadd.f32 0.0, %v92
  %94 = vdwg.mxu0
  %v96 = vsel %vm14, %v30, 0
  %v99 = vsel %vm14, %v31, 0
  %v102 = vsel %vm14, %v32, 0
  %v105 = vsel %vm14, %v33, 0
  %107 = vmatpush.msra.mxu0 0.0
  %108 = vmatpush.msra.mxu0 0.0
  %109 = vmatpush.msra.mxu0 0.0
  %110 = vmatpush.msra.mxu0 0.0
  %111 = vmatpush.msra.mxu0 0.0
  %112 = vmatpush.msra.mxu0 0.0
  %113 = vmatpush.msra.mxu0 0.0
  %114 = vmatpush.msra.mxu0 0.0
  %115 = vmatpush.msra.mxu0 %v41
  %116 = vmatpush.msra.mxu0 %v40
  %117 = vmatpush.msra.mxu0 %v39
  %118 = vmatpush.msra.mxu0 %v38
  %119 = vmatpush.msra.mxu0 %v37
  %120 = vmatpush.msra.mxu0 %v36
  %121 = vmatpush.msra.mxu0 %v35
  %122 = vmatpush.msra.mxu0 %v34
  %123 = vmatmul.f32.gmra.mxu0 %v96
  %v124 = vpop.f32.mrf.mxu0
  %v125 = vadd.f32 %v84, %v124
  %126 = vmatmul.f32.gmra.mxu0 %v99
  %v127 = vpop.f32.mrf.mxu0
  %v128 = vadd.f32 %v87, %v127
  %129 = vmatmul.f32.gmra.mxu0 %v102
  %v130 = vpop.f32.mrf.mxu0
  %v131 = vadd.f32 %v90, %v130
  %132 = vmatmul.f32.gmra.mxu0 %v105
  %v133 = vpop.f32.mrf.mxu0
  %v134 = vadd.f32 %v93, %v133
  %135 = vdwg.mxu0
  %v136 = vld [vmem:[#allocation2 + $0x2] sm:$0xff]
  %v137 = vld [vmem:[#allocation2 + $0xa] sm:$0xff]
  %v138 = vld [vmem:[#allocation2 + $0x1a] sm:$0xff]
  %v139 = vld [vmem:[#allocation2 + $0x22] sm:$0xff]
  %v140 = vld [vmem:[%s1 + $0x80] sm:$0xff]
  %v141 = vld [vmem:[%s1 + $0x88] sm:$0xff]
  %v142 = vld [vmem:[%s1 + $0x90] sm:$0xff]
  %v143 = vld [vmem:[%s1 + $0x98] sm:$0xff]
  %v144 = vld [vmem:[%s1 + $0xa0] sm:$0xff]
  %v145 = vld [vmem:[%s1 + $0xa8] sm:$0xff]
  %v146 = vld [vmem:[%s1 + $0xb0] sm:$0xff]
  %v147 = vld [vmem:[%s1 + $0xb8] sm:$0xff]
  %v149 = vsel %vm14, %v136, 0
  %v152 = vsel %vm14, %v137, 0
  %v155 = vsel %vm14, %v138, 0
  %v158 = vsel %vm14, %v139, 0
  %160 = vmatpush.msra.mxu0 0.0
  %161 = vmatpush.msra.mxu0 0.0
  %162 = vmatpush.msra.mxu0 0.0
  %163 = vmatpush.msra.mxu0 0.0
  %164 = vmatpush.msra.mxu0 0.0
  %165 = vmatpush.msra.mxu0 0.0
  %166 = vmatpush.msra.mxu0 0.0
  %167 = vmatpush.msra.mxu0 0.0
  %168 = vmatpush.msra.mxu0 %v147
  %169 = vmatpush.msra.mxu0 %v146
  %170 = vmatpush.msra.mxu0 %v145
  %171 = vmatpush.msra.mxu0 %v144
  %172 = vmatpush.msra.mxu0 %v143
  %173 = vmatpush.msra.mxu0 %v142
  %174 = vmatpush.msra.mxu0 %v141
  %175 = vmatpush.msra.mxu0 %v140
  %176 = vmatmul.f32.gmra.mxu0 %v149
  %v177 = vpop.f32.mrf.mxu0
  %v178 = vadd.f32 0.0, %v177
  %179 = vmatmul.f32.gmra.mxu0 %v152
  %v180 = vpop.f32.mrf.mxu0
  %v181 = vadd.f32 0.0, %v180
  %182 = vmatmul.f32.gmra.mxu0 %v155
  %v183 = vpop.f32.mrf.mxu0
  %v184 = vadd.f32 0.0, %v183
  %185 = vmatmul.f32.gmra.mxu0 %v158
  %v186 = vpop.f32.mrf.mxu0
  %v187 = vadd.f32 0.0, %v186
  %188 = vdwg.mxu0
  %v189 = vadd.f32 %v125, %v178
  %v190 = vadd.f32 %v128, %v181
  %v191 = vadd.f32 %v131, %v184
  %v192 = vadd.f32 %v134, %v187
  %v193 = vld [vmem:[%s2] sm:$0x1]
  %v195 = vperm.slane %v193, 0
  %v197 = vadd.f32 %v189, %v195
  %v198 = vadd.f32 %v190, %v195
  %v199 = vadd.f32 %v191, %v195
  %v200 = vadd.f32 %v192, %v195
  %v201 = vmax.f32 %v197, 0.0
  %v202 = vmax.f32 %v198, 0.0
  %v203 = vmax.f32 %v199, 0.0
  %v204 = vmax.f32 %v200, 0.0
  %205 = vst [vmem:[%s3] sm:$0xff] %v201
  %206 = vst [vmem:[%s3 + $0x8] sm:$0xff] %v202
  %207 = vst [vmem:[%s3 + $0x10] sm:$0xff] %v203
  %208 = vst [vmem:[%s3 + $0x18] sm:$0xff] %v204
  // Predicated region
  $region14: #{block_forward.1} parent=0 // pred_check
    _
  $region15: #{block_forward.1} parent=0 // pred_check_branch
    %210 = sbr.rel (0) target = $region17
  $region16: #{block_forward.1} parent=0 // pred_region
    _
  $region17: #{block_forward.1} parent=0 // pred_fallthru
    _
  // Predicated region
  $region18: #{block_forward.1} parent=0 // pred_check
    _
  $region19: #{block_forward.1} parent=0 // pred_check_branch
    %212 = sbr.rel (0) target = $region21
  $region20: #{block_forward.1} parent=0 // pred_region
    _
  $region21: #{block_forward.1} parent=0 // pred_fallthru
    _

</llo_original>
